<compile_context>
chip_gen: v5e
topology: v5e:2x2
jax: 0.10.0
libtpu: 0.0.40
codegen_flags: <defaults>
</compile_context>

<pallas_src>
import functools

import jax
import jax.numpy as jnp
from jax.experimental import pallas as pl
from jax.experimental.pallas import tpu as pltpu


def _conv1x1_sigmoid_kernel(x_ref, w_ref, b_ref, o_ref):
    # x_ref: (Cin, TM) f32      w_ref: (TCout, Cin) bf16
    # b_ref: (TCout, 1) f32     o_ref: (TCout, TM) f32
    x_bf16 = x_ref[...].astype(jnp.bfloat16)            # in-kernel cast (VPU filler)
    acc = jnp.dot(w_ref[...], x_bf16, preferred_element_type=jnp.float32)
    acc = acc + b_ref[...]                               # f32 bias add (VPU)
    # Clamp so exp never overflows to inf (robust through the approx reciprocal);
    # sigmoid(+-30) is already 0/1 to f32 precision.
    acc = jnp.clip(acc, -30.0, 30.0)
    # exp on EUP, approximate reciprocal also on EUP (keeps VALU free).
    o_ref[...] = pl.reciprocal(1.0 + jnp.exp(-acc), approx=True)


def prepare_params(weight, bias):
    """One-time (hoisted) param prep: (Cout,Cin,1,1) conv weight -> bf16 matmul
    operand, bias -> f32 column vector."""
    cout, cin = weight.shape[0], weight.shape[1]
    w2d = weight.reshape(cout, cin).astype(jnp.bfloat16)   # (Cout, Cin)
    b_col = bias.reshape(cout, 1).astype(jnp.float32)      # (Cout, 1)
    return w2d, b_col


@functools.partial(jax.jit, static_argnames=("tm", "tcout"))
def conv2d_1x1_sigmoid(x_nchw, w2d, b_col, *, tm=2048, tcout=408):
    """x_nchw: (N, Cin, H, W) f32; w2d: (Cout, Cin) bf16; b_col: (Cout, 1) f32."""
    N, Cin, H, W = x_nchw.shape
    Cout = w2d.shape[0]
    M = H * W  # pixels per batch element

    # NCHW -> (N, Cin, M): pure reshape, no data movement, no dtype cast.
    x3 = x_nchw.reshape(N, Cin, M)

    # Pixel-tile size: either the full extent (single block, any size allowed)
    # or a multiple of 128 with a Pallas-masked ragged final block. No padding.
    if M <= tm:
        tm_eff = M
    else:
        assert tm % 128 == 0, "tm must be a multiple of 128 when tiling M"
        tm_eff = tm
    tcout_eff = min(tcout, Cout)
    assert tcout_eff % 8 == 0 or tcout_eff == Cout

    grid = (N, pl.cdiv(Cout, tcout_eff), pl.cdiv(M, tm_eff))

    out = pl.pallas_call(
        _conv1x1_sigmoid_kernel,
        out_shape=jax.ShapeDtypeStruct((N, Cout, M), jnp.float32),
        grid=grid,
        in_specs=[
            # Streamed f32 pixel tiles; batch dim squeezed out of the kernel view.
            pl.BlockSpec((None, Cin, tm_eff), lambda b, j, i: (b, 0, i)),
            # VMEM-resident weight tile for the current Cout block.
            pl.BlockSpec((tcout_eff, Cin), lambda b, j, i: (j, 0)),
            # VMEM-resident bias column for the current Cout block.
            pl.BlockSpec((tcout_eff, 1), lambda b, j, i: (j, 0)),
        ],
        out_specs=pl.BlockSpec((None, tcout_eff, tm_eff), lambda b, j, i: (b, j, i)),
        compiler_params=pltpu.CompilerParams(
            dimension_semantics=("parallel", "parallel", "parallel"),
        ),
    )(x3, w2d, b_col)

    # (N, Cout, M) -> (N, Cout, H, W): free reshape, already in NCHW order.
    return out.reshape(N, Cout, H, W)


if __name__ == "__main__":
    key = jax.random.PRNGKey(0)
    k_x, k_w, k_b = jax.random.split(key, 3)

    Cin, Cout = 34, 816

    # Deterministic params, PyTorch-style Conv2d init: U(-1/sqrt(fan_in), ...).
    bound = 1.0 / (Cin ** 0.5)
    weight = jax.random.uniform(k_w, (Cout, Cin, 1, 1), jnp.float32, -bound, bound)
    bias = jax.random.uniform(k_b, (Cout,), jnp.float32, -bound, bound)

    # Hoisted one-time param prep (not re-done per call).
    w2d, b_col = prepare_params(weight, bias)

    def reference(x):
        # Plain-JAX f32 reference (1x1 conv == matmul). Kernel uses bf16 MXU
        # weights/inputs + approx reciprocal, so compare with modest tolerance.
        return jax.nn.sigmoid(
            jnp.einsum("nchw,oc->nohw", x, weight.reshape(Cout, Cin))
            + bias[None, :, None, None]
        )

    # 1) The module's own shape: x220 = randn([1, 34, 1, 1]).
    N, H, W = 1, 1, 1
    x = jax.random.normal(k_x, (N, Cin, H, W), dtype=jnp.float32)
    y = jax.block_until_ready(conv2d_1x1_sigmoid(x, w2d, b_col))
    assert y.shape == (N, Cout, H, W)
    assert jnp.allclose(y, reference(x), atol=2e-2), "mismatch vs reference (1x1x1)"

    # 2) Small multi-pixel / batched check exercising the masked ragged final
    #    lane tile (M = 169 -> tiles of 128, last one partial) with no padding.
    N2, H2, W2 = 2, 13, 13
    x2 = jax.random.normal(k_x, (N2, Cin, H2, W2), dtype=jnp.float32)
    y2 = jax.block_until_ready(conv2d_1x1_sigmoid(x2, w2d, b_col, tm=128))
    assert y2.shape == (N2, Cout, H2, W2)
    assert jnp.allclose(y2, reference(x2), atol=2e-2), "mismatch vs reference (ragged)"

    print("KERNEL_OK")
</pallas_src>

<mosaic_0001>
module attributes {stable_mosaic.version = 11 : i64} {
  func.func @_conv1x1_sigmoid_kernel(%arg0: i32, %arg1: i32, %arg2: i32, %arg3: memref<1x34x1xf32, #tpu.memory_space<vmem>>, %arg4: memref<408x34xbf16, #tpu.memory_space<vmem>>, %arg5: memref<408x1xf32, #tpu.memory_space<vmem>>, %arg6: memref<1x408x1xf32, #tpu.memory_space<vmem>>) attributes {dimension_semantics = [#tpu.dimension_semantics<parallel>, #tpu.dimension_semantics<parallel>, #tpu.dimension_semantics<parallel>], iteration_bounds = array<i64: 1, 2, 1>, scalar_prefetch = 0 : i64, scratch_operands = 0 : i64, tpu.core_type = #tpu.core_type<tc>, window_params = [{transform_indices = @transform_0, window_bounds = array<i64: 1, 34, 1>}, {transform_indices = @transform_1, window_bounds = array<i64: 408, 34>}, {transform_indices = @transform_2, window_bounds = array<i64: 408, 1>}, {transform_indices = @transform_3, window_bounds = array<i64: 1, 408, 1>}]} {
    %c0 = arith.constant 0 : index
    %c0_0 = arith.constant 0 : index
    %c0_1 = arith.constant 0 : index
    %0 = vector.load %arg3[%c0, %c0_0, %c0_1] : memref<1x34x1xf32, #tpu.memory_space<vmem>>, vector<1x34x1xf32>
    %1 = vector.shape_cast %0 : vector<1x34x1xf32> to vector<34x1xf32>
    %2 = arith.truncf %1 : vector<34x1xf32> to vector<34x1xbf16>
    %c0_2 = arith.constant 0 : index
    %c0_3 = arith.constant 0 : index
    %3 = vector.load %arg4[%c0_2, %c0_3] : memref<408x34xbf16, #tpu.memory_space<vmem>>, vector<408x34xbf16>
    %cst = arith.constant dense<0.000000e+00> : vector<408x1xf32>
    %4 = tpu.matmul %3, %2, %cst {dimension_numbers = #tpu.dot_dimension_numbers<[1], [0], [0], [1], [0, 0, 1, 1], [], []>} : vector<408x34xbf16>, vector<34x1xbf16>, vector<408x1xf32> -> vector<408x1xf32>
    %c0_4 = arith.constant 0 : index
    %c0_5 = arith.constant 0 : index
    %5 = vector.load %arg5[%c0_4, %c0_5] : memref<408x1xf32, #tpu.memory_space<vmem>>, vector<408x1xf32>
    %6 = arith.addf %4, %5 : vector<408x1xf32>
    %cst_6 = arith.constant -3.000000e+01 : f32
    %cst_7 = arith.constant 3.000000e+01 : f32
    %7 = vector.broadcast %cst_6 : f32 to vector<408x1xf32>
    %8 = arith.maximumf %7, %6 : vector<408x1xf32>
    %9 = vector.broadcast %cst_7 : f32 to vector<408x1xf32>
    %10 = arith.minimumf %9, %8 : vector<408x1xf32>
    %cst_8 = arith.constant 0.000000e+00 : f32
    %11 = vector.broadcast %cst_8 : f32 to vector<408x1xf32>
    %12 = arith.subf %11, %10 : vector<408x1xf32>
    %13 = math.exp %12 : vector<408x1xf32>
    %cst_9 = arith.constant 1.000000e+00 : f32
    %14 = vector.broadcast %cst_9 : f32 to vector<408x1xf32>
    %15 = arith.addf %14, %13 : vector<408x1xf32>
    %16 = tpu.reciprocal %15 {approx = true} : vector<408x1xf32> -> vector<408x1xf32>
    %c0_10 = arith.constant 0 : index
    %c0_11 = arith.constant 0 : index
    %c0_12 = arith.constant 0 : index
    %17 = vector.load %arg6[%c0_10, %c0_11, %c0_12] : memref<1x408x1xf32, #tpu.memory_space<vmem>>, vector<1x408x1xf32>
    %18 = vector.shape_cast %17 : vector<1x408x1xf32> to vector<408x1xf32>
    %19 = vector.shape_cast %16 : vector<408x1xf32> to vector<1x408x1xf32>
    tpu.vector_store %arg6[%c0_10, %c0_11, %c0_12], %19 {strides = array<i32>} : memref<1x408x1xf32, #tpu.memory_space<vmem>>, vector<1x408x1xf32>,
    return
  }
  func.func @transform_0(%arg0: i32, %arg1: i32, %arg2: i32) -> (i32, i32, i32) {
    %c0_i32 = arith.constant 0 : i32
    %c0_i32_0 = arith.constant 0 : i32
    return %arg0, %c0_i32, %arg2 : i32, i32, i32
  }
  func.func @transform_1(%arg0: i32, %arg1: i32, %arg2: i32) -> (i32, i32) {
    %c0_i32 = arith.constant 0 : i32
    %c0_i32_0 = arith.constant 0 : i32
    return %arg1, %c0_i32 : i32, i32
  }
  func.func @transform_2(%arg0: i32, %arg1: i32, %arg2: i32) -> (i32, i32) {
    %c0_i32 = arith.constant 0 : i32
    %c0_i32_0 = arith.constant 0 : i32
    return %arg1, %c0_i32 : i32, i32
  }
  func.func @transform_3(%arg0: i32, %arg1: i32, %arg2: i32) -> (i32, i32, i32) {
    %c0_i32 = arith.constant 0 : i32
    return %arg0, %arg1, %arg2 : i32, i32, i32
  }
}

</mosaic_0001>

<llo_original>
// kernel: conv2d_1x1_sigmoid.1
$region0: #{conv2d_1x1_sigmoid.1}
  #allocation0 [shape = 'u32[]', space=smem, size = 0x4, offset = 0x4, fixed_abs, tag = 'smem constant byte address 0x4 - core index']
  #allocation1 [shape = 'u32[72,128]{1,0:T(1,128)}', space=vmem, size = 0x9000, scoped, tag = 'internal scratch']
  %s0 = inlined_call_operand.vmem [shape: f32[1,34,1], index: 0, kind: input, shape index: {}]
  %s1 = inlined_call_operand.vmem [shape: bf16[816,34], index: 1, kind: input, shape index: {}]
  %s2 = inlined_call_operand.vmem [shape: f32[816,1], index: 2, kind: input, shape index: {}]
  %s3 = inlined_call_operand.vmem [shape: f32[1,816,1], index: 3, kind: output, shape index: {}]
  %s4 = sld [smem:[#allocation0]]
  $region45: #{conv2d_1x1_sigmoid.1} parent=0
    _
  %s6 = ssub.s32 1, %s4
  %s7 = scalar_select 0, %s6, %s4
  loop: start=0, step=1, limit=4
  $region2: #{conv2d_1x1_sigmoid.1} parent=0 // loop_pre_header
    _
  $region3: #{conv2d_1x1_sigmoid.1} parent=0 // loop_header
    %s9 = sphi 0, %s13
    %p10 = scmp.ge.s32.totalorder %s9, 4
    %s16 = sphi 0, %s35
    %s17 = sphi 0, %s31
    %s18 = sphi 0, %s27
    %s19 = sphi 0, %s16
    %s20 = sphi 0, %s17
    %s21 = sphi 0, %s18
    %s22 = sphi 0, %s19
    %s23 = sphi 0, %s20
    %s24 = sphi 0, %s21
    %s40 = sphi 0, %s42
    %s43 = sphi 0, %s40
    %s44 = sphi 0, %s43
    %s60 = sphi 0, %s44
    %s66 = sphi 0, %s68
    %s69 = sphi 0, %s66
    %s70 = sphi 0, %s69
    %s86 = sphi 0, %s70
    %s92 = sphi 0, %s94
    %s95 = sphi 0, %s92
    %s96 = sphi 0, %s95
    %s112 = sphi 0, %s96
    %s122 = sphi 0, %s124
    %s125 = sphi 0, %s122
    %s126 = sphi 0, %s125
    %s142 = sphi 0, %s126
  $region4: #{conv2d_1x1_sigmoid.1} parent=0 // loop_header_branch
    %12 = sbr.rel (%p10) target = $region8
  $region5: #{conv2d_1x1_sigmoid.1} parent=0 // loop_body
    %s14 = ssub.s32 %s9, 1
    %s15 = ssub.s32 %s9, 2
    %s25 = sadd.s32 1, %s18
    %p26 = scmp.ge.s32.totalorder %s25, 1
    %s27 = scalar_select %p26, 0, %s25
    %s28 = sadd.s32 1, %s17
    %s29 = scalar_select %p26, %s28, %s17
    %p30 = scmp.ge.s32.totalorder %s29, 2
    %s31 = scalar_select %p30, 0, %s29
    %s32 = sadd.s32 1, %s16
    %s33 = scalar_select %p30, %s32, %s16
    %p34 = scmp.ge.s32.totalorder %s33, 1
    %s35 = scalar_select %p34, 0, %s33
    %s36 = ssub.s32 %s16, %s35
    %s37 = ssub.s32 %s18, %s27
    %s38 = sor.u32 %s36, %s37
    %p39 = scmp.eq.s32.totalorder %s38, 0
    %s41 = sadd.s32 %s40, 1
    %s42 = scalar_select %p39, %s40, %s41
    %p45 = pneg %p39
    %p46 = scmp.eq.s32.totalorder %s9, 1
    %p47 = por %p45, %p46
    %p48 = scmp.ne.s32.totalorder %s40, %s43
    %p49 = scmp.eq.s32.totalorder %s9, 0
    %p50 = por %p48, %p49
    %p51 = scmp.ne.s32.totalorder %s40, %s43
    %p52 = scmp.eq.s32.totalorder %s14, 1
    %p53 = por %p51, %p52
    %p54 = scmp.ne.s32.totalorder %s43, %s44
    %p55 = scmp.eq.s32.totalorder %s14, 0
    %p56 = por %p54, %p55
    %p57 = scmp.ne.s32.totalorder %s43, %s44
    %p58 = scmp.eq.s32.totalorder %s15, 1
    %p59 = por %p57, %p58
    %p61 = scmp.ne.s32.totalorder %s44, %s60
    %p62 = scmp.eq.s32.totalorder %s15, 0
    %p63 = por %p61, %p62
    %s64 = ssub.s32 %s17, %s31
    %p65 = scmp.eq.s32.totalorder %s64, 0
    %s67 = sadd.s32 %s66, 1
    %s68 = scalar_select %p65, %s66, %s67
    %p71 = pneg %p65
    %p72 = scmp.eq.s32.totalorder %s9, 1
    %p73 = por %p71, %p72
    %p74 = scmp.ne.s32.totalorder %s66, %s69
    %p75 = scmp.eq.s32.totalorder %s9, 0
    %p76 = por %p74, %p75
    %p77 = scmp.ne.s32.totalorder %s66, %s69
    %p78 = scmp.eq.s32.totalorder %s14, 1
    %p79 = por %p77, %p78
    %p80 = scmp.ne.s32.totalorder %s69, %s70
    %p81 = scmp.eq.s32.totalorder %s14, 0
    %p82 = por %p80, %p81
    %p83 = scmp.ne.s32.totalorder %s69, %s70
    %p84 = scmp.eq.s32.totalorder %s15, 1
    %p85 = por %p83, %p84
    %p87 = scmp.ne.s32.totalorder %s70, %s86
    %p88 = scmp.eq.s32.totalorder %s15, 0
    %p89 = por %p87, %p88
    %s90 = ssub.s32 %s17, %s31
    %p91 = scmp.eq.s32.totalorder %s90, 0
    %s93 = sadd.s32 %s92, 1
    %s94 = scalar_select %p91, %s92, %s93
    %p97 = pneg %p91
    %p98 = scmp.eq.s32.totalorder %s9, 1
    %p99 = por %p97, %p98
    %p100 = scmp.ne.s32.totalorder %s92, %s95
    %p101 = scmp.eq.s32.totalorder %s9, 0
    %p102 = por %p100, %p101
    %p103 = scmp.ne.s32.totalorder %s92, %s95
    %p104 = scmp.eq.s32.totalorder %s14, 1
    %p105 = por %p103, %p104
    %p106 = scmp.ne.s32.totalorder %s95, %s96
    %p107 = scmp.eq.s32.totalorder %s14, 0
    %p108 = por %p106, %p107
    %p109 = scmp.ne.s32.totalorder %s95, %s96
    %p110 = scmp.eq.s32.totalorder %s15, 1
    %p111 = por %p109, %p110
    %p113 = scmp.ne.s32.totalorder %s96, %s112
    %p114 = scmp.eq.s32.totalorder %s15, 0
    %p115 = por %p113, %p114
    %s116 = ssub.s32 %s16, %s35
    %s117 = ssub.s32 %s17, %s31
    %s118 = sor.u32 %s116, %s117
    %s119 = ssub.s32 %s18, %s27
    %s120 = sor.u32 %s118, %s119
    %p121 = scmp.eq.s32.totalorder %s120, 0
    %s123 = sadd.s32 %s122, 1
    %s124 = scalar_select %p121, %s122, %s123
    %p127 = pneg %p121
    %p128 = scmp.eq.s32.totalorder %s9, 1
    %p129 = por %p127, %p128
    %p130 = scmp.ne.s32.totalorder %s122, %s125
    %p131 = scmp.eq.s32.totalorder %s9, 0
    %p132 = por %p130, %p131
    %p133 = scmp.ne.s32.totalorder %s122, %s125
    %p134 = scmp.eq.s32.totalorder %s14, 1
    %p135 = por %p133, %p134
    %p136 = scmp.ne.s32.totalorder %s125, %s126
    %p137 = scmp.eq.s32.totalorder %s14, 0
    %p138 = por %p136, %p137
    %p139 = scmp.ne.s32.totalorder %s125, %s126
    %p140 = scmp.eq.s32.totalorder %s15, 1
    %p141 = por %p139, %p140
    %p143 = scmp.ne.s32.totalorder %s126, %s142
    %p144 = scmp.eq.s32.totalorder %s15, 0
    %p145 = por %p143, %p144
    %p146 = scmp.le.s32.totalorder 1, %s9
    %p147 = scmp.lt.s32.totalorder %s9, 3
    %p148 = pnand %p146, %p147
    %p149 = pneg %p148
    // Predicated region
    $region9: #{conv2d_1x1_sigmoid.1} parent=5 // pred_check
      _
    $region10: #{conv2d_1x1_sigmoid.1} parent=5 // pred_check_branch
      %151 = sbr.rel (%p148) target = $region12
    $region11: #{conv2d_1x1_sigmoid.1} parent=5 // pred_region
      %s152 = ssub.s32 %s9, 1
      // Predicated region
      $region13: #{conv2d_1x1_sigmoid.1} parent=11 // pred_check
        %p153 = pneg %p56
      $region14: #{conv2d_1x1_sigmoid.1} parent=11 // pred_check_branch
        %155 = sbr.rel (%p153) target = $region16
      $region15: #{conv2d_1x1_sigmoid.1} parent=11 // pred_region
        %p156 = scmp.lt.s32.totalorder %s19, 0
        %s157 = scalar_select %p156, %s19, 0
        %p158 = scmp.lt.s32.totalorder %s21, 0
        %s159 = scalar_select %p158, %s21, 0
        %s160 = smul.addr %s157, 5
        %s161 = sadd.s32 %s159, %s160
        %s162 = smul.addr %s161, 8
        %s163 = scalar_lea.vmem %s0, %s162
      $region16: #{conv2d_1x1_sigmoid.1} parent=11 // pred_fallthru
        _
    $region12: #{conv2d_1x1_sigmoid.1} parent=5 // pred_fallthru
      _
    %p164 = scmp.lt.s32.totalorder %s9, 2
    // Predicated region
    $region17: #{conv2d_1x1_sigmoid.1} parent=5 // pred_check
      %p165 = pneg %p164
    $region18: #{conv2d_1x1_sigmoid.1} parent=5 // pred_check_branch
      %167 = sbr.rel (%p165) target = $region20
    $region19: #{conv2d_1x1_sigmoid.1} parent=5 // pred_region
      // Predicated region
      $region21: #{conv2d_1x1_sigmoid.1} parent=19 // pred_check
        %p168 = pneg %p76
      $region22: #{conv2d_1x1_sigmoid.1} parent=19 // pred_check_branch
        %170 = sbr.rel (%p168) target = $region24
      $region23: #{conv2d_1x1_sigmoid.1} parent=19 // pred_region
        %s171 = smul.u32 51, %s17
        %p172 = scmp.lt.s32.totalorder %s171, 101
        %s173 = scalar_select %p172, %s171, 101
        %s174 = smul.addr %s173, 4
        %s175 = scalar_lea.vmem %s1, %s174
        %s176 = smul.u32 51, %s17
      $region24: #{conv2d_1x1_sigmoid.1} parent=19 // pred_fallthru
        _
      // Predicated region
      $region25: #{conv2d_1x1_sigmoid.1} parent=19 // pred_check
        %p177 = pneg %p102
      $region26: #{conv2d_1x1_sigmoid.1} parent=19 // pred_check_branch
        %179 = sbr.rel (%p177) target = $region28
      $region27: #{conv2d_1x1_sigmoid.1} parent=19 // pred_region
        %s180 = smul.u32 51, %s17
        %p181 = scmp.lt.s32.totalorder %s180, 101
        %s182 = scalar_select %p181, %s180, 101
        %s183 = smul.addr %s182, 8
        %s184 = scalar_lea.vmem %s2, %s183
        %s185 = smul.u32 51, %s17
      $region28: #{conv2d_1x1_sigmoid.1} parent=19 // pred_fallthru
        _
    $region20: #{conv2d_1x1_sigmoid.1} parent=5 // pred_fallthru
      _
    %p186 = scmp.le.s32.totalorder 1, %s9
    %p187 = scmp.lt.s32.totalorder %s9, 3
    %p188 = pnand %p186, %p187
    %p189 = pneg %p188
    // Predicated region
    $region29: #{conv2d_1x1_sigmoid.1} parent=5 // pred_check
      _
    $region30: #{conv2d_1x1_sigmoid.1} parent=5 // pred_check_branch
      %191 = sbr.rel (%p188) target = $region32
    $region31: #{conv2d_1x1_sigmoid.1} parent=5 // pred_region
      %s192 = ssub.s32 %s9, 1
      %p193 = scmp.lt.s32.totalorder %s19, 0
      %s194 = scalar_select %p193, %s19, 0
      %p195 = scmp.lt.s32.totalorder %s21, 0
      %s196 = scalar_select %p195, %s21, 0
      %s197 = smul.addr %s194, 5
      %s198 = sadd.s32 %s196, %s197
      %s199 = smul.addr %s198, 8
      %s200 = scalar_lea.vmem %s0, %s199
      %p201 = pneg %p56
      %p202 = pneg %p53
      %s203 = smul.u32 51, %s20
      %p204 = scmp.lt.s32.totalorder %s203, 101
      %s205 = scalar_select %p204, %s203, 101
      %s206 = smul.addr %s205, 4
      %s207 = scalar_lea.vmem %s1, %s206
      %p208 = pneg %p82
      %p209 = pneg %p79
      %s210 = smul.u32 51, %s20
      %p211 = scmp.lt.s32.totalorder %s210, 101
      %s212 = scalar_select %p211, %s210, 101
      %s213 = smul.addr %s212, 8
      %s214 = scalar_lea.vmem %s2, %s213
      %p215 = pneg %p108
      %p216 = pneg %p105
      %p217 = pneg %p138
      %p218 = pneg %p135
      %s219 = smul.u32 51, %s20
      %p220 = scmp.lt.s32.totalorder %s19, 0
      %s221 = scalar_select %p220, %s19, 0
      %p222 = scmp.lt.s32.totalorder %s219, 101
      %s223 = scalar_select %p222, %s219, 101
      %p224 = scmp.lt.s32.totalorder %s21, 0
      %s225 = scalar_select %p224, %s21, 0
      %s226 = sadd.s32 %s225, %s223
      %s227 = smul.addr %s221, 102
      %s228 = sadd.s32 %s226, %s227
      %s229 = smul.addr %s228, 8
      %s230 = scalar_lea.vmem %s3, %s229
      %p231 = scmp.lt.s32.totalorder %s19, 0
      %s232 = scalar_select %p231, %s19, 0
      %p233 = scmp.lt.s32.totalorder %s21, 0
      %s234 = scalar_select %p233, %s21, 0
      %s235 = smul.addr %s232, 5
      %s236 = sadd.s32 %s234, %s235
      %s237 = smul.addr %s236, 8
      %s238 = scalar_lea.vmem %s0, %s237
      %s239 = smul.u32 51, %s20
      %p240 = scmp.lt.s32.totalorder %s239, 101
      %s241 = scalar_select %p240, %s239, 101
      %s242 = smul.addr %s241, 4
      %s243 = scalar_lea.vmem %s1, %s242
      %s244 = smul.u32 51, %s20
      %s245 = smul.u32 51, %s20
      %p246 = scmp.lt.s32.totalorder %s245, 101
      %s247 = scalar_select %p246, %s245, 101
      %s248 = smul.addr %s247, 8
      %s249 = scalar_lea.vmem %s2, %s248
      %s250 = smul.u32 51, %s20
      %s251 = smul.u32 51, %s20
      %p252 = scmp.lt.s32.totalorder %s19, 0
      %s253 = scalar_select %p252, %s19, 0
      %p254 = scmp.lt.s32.totalorder %s251, 101
      %s255 = scalar_select %p254, %s251, 101
      %p256 = scmp.lt.s32.totalorder %s21, 0
      %s257 = scalar_select %p256, %s21, 0
      %s258 = sadd.s32 %s257, %s255
      %s259 = smul.addr %s253, 102
      %s260 = sadd.s32 %s258, %s259
      %s261 = smul.addr %s260, 8
      %s262 = scalar_lea.vmem %s3, %s261
      %s263 = smul.u32 51, %s20
      %v265 = vld [vmem:[%s238] sm:$0xff]
      %v266 = vld [vmem:[%s238 + $0x8] sm:$0xff]
      %v267 = vld [vmem:[%s238 + $0x10] sm:$0xff]
      %v268 = vld [vmem:[%s238 + $0x18] sm:$0xff]
      %v269 = vld [vmem:[%s238 + $0x20] sm:$0x3]
      %v270 = vpack.c.bf16 %v266, %v265
      %v271 = vpack.c.bf16 %v268, %v267
      %v272 = vpack.c.bf16 %v269, %v269
      %v273 = vld [vmem:[%s243] sm:$0xf]
      %v274 = vld [vmem:[%s243 + $0x4] sm:$0xf]
      %v275 = vld [vmem:[%s243 + $0x8] sm:$0xf]
      %v276 = vld [vmem:[%s243 + $0xc] sm:$0xf]
      %v277 = vld [vmem:[%s243 + $0x10] sm:$0xf]
      %v278 = vld [vmem:[%s243 + $0x14] sm:$0xf]
      %v279 = vld [vmem:[%s243 + $0x18] sm:$0xf]
      %v280 = vld [vmem:[%s243 + $0x1c] sm:$0xf]
      %v281 = vld [vmem:[%s243 + $0x20] sm:$0xf]
      %v282 = vld [vmem:[%s243 + $0x24] sm:$0xf]
      %v283 = vld [vmem:[%s243 + $0x28] sm:$0xf]
      %v284 = vld [vmem:[%s243 + $0x2c] sm:$0xf]
      %v285 = vld [vmem:[%s243 + $0x30] sm:$0xf]
      %v286 = vld [vmem:[%s243 + $0x34] sm:$0xf]
      %v287 = vld [vmem:[%s243 + $0x38] sm:$0xf]
      %v288 = vld [vmem:[%s243 + $0x3c] sm:$0xf]
      %v289 = vld [vmem:[%s243 + $0x40] sm:$0xf]
      %v290 = vld [vmem:[%s243 + $0x44] sm:$0xf]
      %v291 = vld [vmem:[%s243 + $0x48] sm:$0xf]
      %v292 = vld [vmem:[%s243 + $0x4c] sm:$0xf]
      %v293 = vld [vmem:[%s243 + $0x50] sm:$0xf]
      %v294 = vld [vmem:[%s243 + $0x54] sm:$0xf]
      %v295 = vld [vmem:[%s243 + $0x58] sm:$0xf]
      %v296 = vld [vmem:[%s243 + $0x5c] sm:$0xf]
      %v297 = vld [vmem:[%s243 + $0x60] sm:$0xf]
      %v298 = vld [vmem:[%s243 + $0x64] sm:$0xf]
      %v299 = vld [vmem:[%s243 + $0x68] sm:$0xf]
      %v300 = vld [vmem:[%s243 + $0x6c] sm:$0xf]
      %v301 = vld [vmem:[%s243 + $0x70] sm:$0xf]
      %v302 = vld [vmem:[%s243 + $0x74] sm:$0xf]
      %v303 = vld [vmem:[%s243 + $0x78] sm:$0xf]
      %v304 = vld [vmem:[%s243 + $0x7c] sm:$0xf]
      %v305 = vld [vmem:[%s243 + $0x80] sm:$0xf]
      %v306 = vld [vmem:[%s243 + $0x84] sm:$0xf]
      %v307 = vld [vmem:[%s243 + $0x88] sm:$0xf]
      %v308 = vld [vmem:[%s243 + $0x8c] sm:$0xf]
      %v309 = vld [vmem:[%s243 + $0x90] sm:$0xf]
      %v310 = vld [vmem:[%s243 + $0x94] sm:$0xf]
      %v311 = vld [vmem:[%s243 + $0x98] sm:$0xf]
      %v312 = vld [vmem:[%s243 + $0x9c] sm:$0xf]
      %v313 = vld [vmem:[%s243 + $0xa0] sm:$0xf]
      %v314 = vld [vmem:[%s243 + $0xa4] sm:$0xf]
      %v315 = vld [vmem:[%s243 + $0xa8] sm:$0xf]
      %v316 = vld [vmem:[%s243 + $0xac] sm:$0xf]
      %v317 = vld [vmem:[%s243 + $0xb0] sm:$0xf]
      %v318 = vld [vmem:[%s243 + $0xb4] sm:$0xf]
      %v319 = vld [vmem:[%s243 + $0xb8] sm:$0xf]
      %v320 = vld [vmem:[%s243 + $0xbc] sm:$0xf]
      %v321 = vld [vmem:[%s243 + $0xc0] sm:$0xf]
      %v322 = vld [vmem:[%s243 + $0xc4] sm:$0xf]
      %v323 = vld [vmem:[%s243 + $0xc8] sm:$0xf]
      %v324 = vld [vmem:[%s249] sm:$0xff]
      %v325 = vld [vmem:[%s249 + $0x8] sm:$0xff]
      %v326 = vld [vmem:[%s249 + $0x10] sm:$0xff]
      %v327 = vld [vmem:[%s249 + $0x18] sm:$0xff]
      %v328 = vld [vmem:[%s249 + $0x20] sm:$0xff]
      %v329 = vld [vmem:[%s249 + $0x28] sm:$0xff]
      %v330 = vld [vmem:[%s249 + $0x30] sm:$0xff]
      %v331 = vld [vmem:[%s249 + $0x38] sm:$0xff]
      %v332 = vld [vmem:[%s249 + $0x40] sm:$0xff]
      %v333 = vld [vmem:[%s249 + $0x48] sm:$0xff]
      %v334 = vld [vmem:[%s249 + $0x50] sm:$0xff]
      %v335 = vld [vmem:[%s249 + $0x58] sm:$0xff]
      %v336 = vld [vmem:[%s249 + $0x60] sm:$0xff]
      %v337 = vld [vmem:[%s249 + $0x68] sm:$0xff]
      %v338 = vld [vmem:[%s249 + $0x70] sm:$0xff]
      %v339 = vld [vmem:[%s249 + $0x78] sm:$0xff]
      %v340 = vld [vmem:[%s249 + $0x80] sm:$0xff]
      %v341 = vld [vmem:[%s249 + $0x88] sm:$0xff]
      %v342 = vld [vmem:[%s249 + $0x90] sm:$0xff]
      %v343 = vld [vmem:[%s249 + $0x98] sm:$0xff]
      %v344 = vld [vmem:[%s249 + $0xa0] sm:$0xff]
      %v345 = vld [vmem:[%s249 + $0xa8] sm:$0xff]
      %v346 = vld [vmem:[%s249 + $0xb0] sm:$0xff]
      %v347 = vld [vmem:[%s249 + $0xb8] sm:$0xff]
      %v348 = vld [vmem:[%s249 + $0xc0] sm:$0xff]
      %v349 = vld [vmem:[%s249 + $0xc8] sm:$0xff]
      %v350 = vld [vmem:[%s249 + $0xd0] sm:$0xff]
      %v351 = vld [vmem:[%s249 + $0xd8] sm:$0xff]
      %v352 = vld [vmem:[%s249 + $0xe0] sm:$0xff]
      %v353 = vld [vmem:[%s249 + $0xe8] sm:$0xff]
      %v354 = vld [vmem:[%s249 + $0xf0] sm:$0xff]
      %v355 = vld [vmem:[%s249 + $0xf8] sm:$0xff]
      %v356 = vld [vmem:[%s249 + $0x100] sm:$0xff]
      %v357 = vld [vmem:[%s249 + $0x108] sm:$0xff]
      %v358 = vld [vmem:[%s249 + $0x110] sm:$0xff]
      %v359 = vld [vmem:[%s249 + $0x118] sm:$0xff]
      %v360 = vld [vmem:[%s249 + $0x120] sm:$0xff]
      %v361 = vld [vmem:[%s249 + $0x128] sm:$0xff]
      %v362 = vld [vmem:[%s249 + $0x130] sm:$0xff]
      %v363 = vld [vmem:[%s249 + $0x138] sm:$0xff]
      %v364 = vld [vmem:[%s249 + $0x140] sm:$0xff]
      %v365 = vld [vmem:[%s249 + $0x148] sm:$0xff]
      %v366 = vld [vmem:[%s249 + $0x150] sm:$0xff]
      %v367 = vld [vmem:[%s249 + $0x158] sm:$0xff]
      %v368 = vld [vmem:[%s249 + $0x160] sm:$0xff]
      %v369 = vld [vmem:[%s249 + $0x168] sm:$0xff]
      %v370 = vld [vmem:[%s249 + $0x170] sm:$0xff]
      %v371 = vld [vmem:[%s249 + $0x178] sm:$0xff]
      %v372 = vld [vmem:[%s249 + $0x180] sm:$0xff]
      %v373 = vld [vmem:[%s249 + $0x188] sm:$0xff]
      %v374 = vld [vmem:[%s249 + $0x190] sm:$0xff]
      %v426 = vunpack.c.l.b16 %v273
      %v427 = vunpack.c.l.b16 %v274
      %v428 = vunpack.c.l.b16 %v275
      %v429 = vunpack.c.l.b16 %v276
      %v430 = vunpack.c.l.b16 %v277
      %v431 = vunpack.c.l.b16 %v278
      %v432 = vunpack.c.l.b16 %v279
      %v433 = vunpack.c.l.b16 %v280
      %v434 = vunpack.c.l.b16 %v281
      %v435 = vunpack.c.l.b16 %v282
      %v436 = vunpack.c.l.b16 %v283
      %v437 = vunpack.c.l.b16 %v284
      %v438 = vunpack.c.l.b16 %v285
      %v439 = vunpack.c.l.b16 %v286
      %v440 = vunpack.c.l.b16 %v287
      %v441 = vunpack.c.l.b16 %v288
      %v442 = vunpack.c.l.b16 %v289
      %v443 = vunpack.c.l.b16 %v290
      %v444 = vunpack.c.l.b16 %v291
      %v445 = vunpack.c.l.b16 %v292
      %v446 = vunpack.c.l.b16 %v293
      %v447 = vunpack.c.l.b16 %v294
      %v448 = vunpack.c.l.b16 %v295
      %v449 = vunpack.c.l.b16 %v296
      %v450 = vunpack.c.l.b16 %v297
      %v451 = vunpack.c.l.b16 %v298
      %v452 = vunpack.c.l.b16 %v299
      %v453 = vunpack.c.l.b16 %v300
      %v454 = vunpack.c.l.b16 %v301
      %v455 = vunpack.c.l.b16 %v302
      %v456 = vunpack.c.l.b16 %v303
      %v457 = vunpack.c.l.b16 %v304
      %v458 = vunpack.c.l.b16 %v305
      %v459 = vunpack.c.l.b16 %v306
      %v460 = vunpack.c.l.b16 %v307
      %v461 = vunpack.c.l.b16 %v308
      %v462 = vunpack.c.l.b16 %v309
      %v463 = vunpack.c.l.b16 %v310
      %v464 = vunpack.c.l.b16 %v311
      %v465 = vunpack.c.l.b16 %v312
      %v466 = vunpack.c.l.b16 %v313
      %v467 = vunpack.c.l.b16 %v314
      %v468 = vunpack.c.l.b16 %v315
      %v469 = vunpack.c.l.b16 %v316
      %v470 = vunpack.c.l.b16 %v317
      %v471 = vunpack.c.l.b16 %v318
      %v472 = vunpack.c.l.b16 %v319
      %v473 = vunpack.c.l.b16 %v320
      %v474 = vunpack.c.l.b16 %v321
      %v475 = vunpack.c.l.b16 %v322
      %v476 = vunpack.c.l.b16 %v323
      %v477 = vpack.c.b16 %v427, %v426
      %v478 = vpack.c.b16 %v429, %v428
      %v479 = vpack.c.b16 %v431, %v430
      %v480 = vpack.c.b16 %v433, %v432
      %v481 = vpack.c.b16 %v435, %v434
      %v482 = vpack.c.b16 %v437, %v436
      %v483 = vpack.c.b16 %v439, %v438
      %v484 = vpack.c.b16 %v441, %v440
      %v485 = vpack.c.b16 %v443, %v442
      %v486 = vpack.c.b16 %v445, %v444
      %v487 = vpack.c.b16 %v447, %v446
      %v488 = vpack.c.b16 %v449, %v448
      %v489 = vpack.c.b16 %v451, %v450
      %v490 = vpack.c.b16 %v453, %v452
      %v491 = vpack.c.b16 %v455, %v454
      %v492 = vpack.c.b16 %v457, %v456
      %v493 = vpack.c.b16 %v459, %v458
      %v494 = vpack.c.b16 %v461, %v460
      %v495 = vpack.c.b16 %v463, %v462
      %v496 = vpack.c.b16 %v465, %v464
      %v497 = vpack.c.b16 %v467, %v466
      %v498 = vpack.c.b16 %v469, %v468
      %v499 = vpack.c.b16 %v471, %v470
      %v500 = vpack.c.b16 %v473, %v472
      %v501 = vpack.c.b16 %v475, %v474
      %v502 = vpack.c.b16 %v476, %v476
      %vm503 = vcmask 277504
      %v505 = vsel %vm503, %v477, 0
      %v508 = vsel %vm503, %v478, 0
      %v511 = vsel %vm503, %v479, 0
      %v514 = vsel %vm503, %v480, 0
      %v517 = vsel %vm503, %v481, 0
      %v520 = vsel %vm503, %v482, 0
      %v523 = vsel %vm503, %v483, 0
      %v526 = vsel %vm503, %v484, 0
      %v529 = vsel %vm503, %v485, 0
      %v532 = vsel %vm503, %v486, 0
      %v535 = vsel %vm503, %v487, 0
      %v538 = vsel %vm503, %v488, 0
      %v541 = vsel %vm503, %v489, 0
      %v544 = vsel %vm503, %v490, 0
      %v547 = vsel %vm503, %v491, 0
      %v550 = vsel %vm503, %v492, 0
      %v553 = vsel %vm503, %v493, 0
      %v556 = vsel %vm503, %v494, 0
      %v559 = vsel %vm503, %v495, 0
      %v562 = vsel %vm503, %v496, 0
      %v565 = vsel %vm503, %v497, 0
      %v568 = vsel %vm503, %v498, 0
      %v571 = vsel %vm503, %v499, 0
      %v574 = vsel %vm503, %v500, 0
      %v577 = vsel %vm503, %v501, 0
      %v580 = vsel %vm503, %v502, 0
      %vm582 = vcmask 1040384
      %v584 = vsel %vm582, %v272, 0
      %586 = vmatpush.bf16.msra.mxu0 0
      %587 = vmatpush.bf16.msra.mxu0 0
      %588 = vmatpush.bf16.msra.mxu0 0
      %589 = vmatpush.bf16.msra.mxu0 0
      %590 = vmatpush.bf16.msra.mxu0 0
      %591 = vmatpush.bf16.msra.mxu0 %v584
      %592 = vmatpush.bf16.msra.mxu0 %v271
      %593 = vmatpush.bf16.msra.mxu0 %v270
      %594 = vmatmul.bf16.gmra.mxu0 %v505
      %v595 = vpop.f32.mrf.mxu0
      %v596 = vadd.f32 %v324, %v595
      %v597 = vpop.f32.mrf.mxu0
      %v598 = vadd.f32 %v325, %v597
      %599 = vmatmul.bf16.gmra.mxu0 %v508
      %v600 = vpop.f32.mrf.mxu0
      %v601 = vadd.f32 %v326, %v600
      %v602 = vpop.f32.mrf.mxu0
      %v603 = vadd.f32 %v327, %v602
      %604 = vmatmul.bf16.gmra.mxu0 %v511
      %v605 = vpop.f32.mrf.mxu0
      %v606 = vadd.f32 %v328, %v605
      %v607 = vpop.f32.mrf.mxu0
      %v608 = vadd.f32 %v329, %v607
      %609 = vmatmul.bf16.gmra.mxu0 %v514
      %v610 = vpop.f32.mrf.mxu0
      %v611 = vadd.f32 %v330, %v610
      %v612 = vpop.f32.mrf.mxu0
      %v613 = vadd.f32 %v331, %v612
      %614 = vmatmul.bf16.gmra.mxu0 %v517
      %v615 = vpop.f32.mrf.mxu0
      %v616 = vadd.f32 %v332, %v615
      %v617 = vpop.f32.mrf.mxu0
      %v618 = vadd.f32 %v333, %v617
      %619 = vmatmul.bf16.gmra.mxu0 %v520
      %v620 = vpop.f32.mrf.mxu0
      %v621 = vadd.f32 %v334, %v620
      %v622 = vpop.f32.mrf.mxu0
      %v623 = vadd.f32 %v335, %v622
      %624 = vmatmul.bf16.gmra.mxu0 %v523
      %v625 = vpop.f32.mrf.mxu0
      %v626 = vadd.f32 %v336, %v625
      %v627 = vpop.f32.mrf.mxu0
      %v628 = vadd.f32 %v337, %v627
      %629 = vmatmul.bf16.gmra.mxu0 %v526
      %v630 = vpop.f32.mrf.mxu0
      %v631 = vadd.f32 %v338, %v630
      %v632 = vpop.f32.mrf.mxu0
      %v633 = vadd.f32 %v339, %v632
      %634 = vmatmul.bf16.gmra.mxu0 %v529
      %v635 = vpop.f32.mrf.mxu0
      %v636 = vadd.f32 %v340, %v635
      %v637 = vpop.f32.mrf.mxu0
      %v638 = vadd.f32 %v341, %v637
      %639 = vmatmul.bf16.gmra.mxu0 %v532
      %v640 = vpop.f32.mrf.mxu0
      %v641 = vadd.f32 %v342, %v640
      %v642 = vpop.f32.mrf.mxu0
      %v643 = vadd.f32 %v343, %v642
      %644 = vmatmul.bf16.gmra.mxu0 %v535
      %v645 = vpop.f32.mrf.mxu0
      %v646 = vadd.f32 %v344, %v645
      %v647 = vpop.f32.mrf.mxu0
      %v648 = vadd.f32 %v345, %v647
      %649 = vmatmul.bf16.gmra.mxu0 %v538
      %v650 = vpop.f32.mrf.mxu0
      %v651 = vadd.f32 %v346, %v650
      %v652 = vpop.f32.mrf.mxu0
      %v653 = vadd.f32 %v347, %v652
      %654 = vmatmul.bf16.gmra.mxu0 %v541
      %v655 = vpop.f32.mrf.mxu0
      %v656 = vadd.f32 %v348, %v655
      %v657 = vpop.f32.mrf.mxu0
      %v658 = vadd.f32 %v349, %v657
      %659 = vmatmul.bf16.gmra.mxu0 %v544
      %v660 = vpop.f32.mrf.mxu0
      %v661 = vadd.f32 %v350, %v660
      %v662 = vpop.f32.mrf.mxu0
      %v663 = vadd.f32 %v351, %v662
      %664 = vmatmul.bf16.gmra.mxu0 %v547
      %v665 = vpop.f32.mrf.mxu0
      %v666 = vadd.f32 %v352, %v665
      %v667 = vpop.f32.mrf.mxu0
      %v668 = vadd.f32 %v353, %v667
      %669 = vmatmul.bf16.gmra.mxu0 %v550
      %v670 = vpop.f32.mrf.mxu0
      %v671 = vadd.f32 %v354, %v670
      %v672 = vpop.f32.mrf.mxu0
      %v673 = vadd.f32 %v355, %v672
      %674 = vmatmul.bf16.gmra.mxu0 %v553
      %v675 = vpop.f32.mrf.mxu0
      %v676 = vadd.f32 %v356, %v675
      %v677 = vpop.f32.mrf.mxu0
      %v678 = vadd.f32 %v357, %v677
      %679 = vmatmul.bf16.gmra.mxu0 %v556
      %v680 = vpop.f32.mrf.mxu0
      %v681 = vadd.f32 %v358, %v680
      %v682 = vpop.f32.mrf.mxu0
      %v683 = vadd.f32 %v359, %v682
      %684 = vmatmul.bf16.gmra.mxu0 %v559
      %v685 = vpop.f32.mrf.mxu0
      %v686 = vadd.f32 %v360, %v685
      %v687 = vpop.f32.mrf.mxu0
      %v688 = vadd.f32 %v361, %v687
      %689 = vmatmul.bf16.gmra.mxu0 %v562
      %v690 = vpop.f32.mrf.mxu0
      %v691 = vadd.f32 %v362, %v690
      %v692 = vpop.f32.mrf.mxu0
      %v693 = vadd.f32 %v363, %v692
      %694 = vmatmul.bf16.gmra.mxu0 %v565
      %v695 = vpop.f32.mrf.mxu0
      %v696 = vadd.f32 %v364, %v695
      %v697 = vpop.f32.mrf.mxu0
      %v698 = vadd.f32 %v365, %v697
      %699 = vmatmul.bf16.gmra.mxu0 %v568
      %v700 = vpop.f32.mrf.mxu0
      %v701 = vadd.f32 %v366, %v700
      %v702 = vpop.f32.mrf.mxu0
      %v703 = vadd.f32 %v367, %v702
      %704 = vmatmul.bf16.gmra.mxu0 %v571
      %v705 = vpop.f32.mrf.mxu0
      %v706 = vadd.f32 %v368, %v705
      %v707 = vpop.f32.mrf.mxu0
      %v708 = vadd.f32 %v369, %v707
      %709 = vmatmul.bf16.gmra.mxu0 %v574
      %v710 = vpop.f32.mrf.mxu0
      %v711 = vadd.f32 %v370, %v710
      %v712 = vpop.f32.mrf.mxu0
      %v713 = vadd.f32 %v371, %v712
      %714 = vmatmul.bf16.gmra.mxu0 %v577
      %v715 = vpop.f32.mrf.mxu0
      %v716 = vadd.f32 %v372, %v715
      %v717 = vpop.f32.mrf.mxu0
      %v718 = vadd.f32 %v373, %v717
      %719 = vmatmul.bf16.gmra.mxu0 %v580
      %v720 = vpop.f32.mrf.mxu0
      %v721 = vadd.f32 %v374, %v720
      %v722 = vpop.f32.mrf.mxu0
      %723 = vdwg.mxu0
      %v724 = vmax.f32 %v596, -30.0
      %v725 = vmax.f32 %v598, -30.0
      %v726 = vmax.f32 %v601, -30.0
      %v727 = vmax.f32 %v603, -30.0
      %v728 = vmax.f32 %v606, -30.0
      %v729 = vmax.f32 %v608, -30.0
      %v730 = vmax.f32 %v611, -30.0
      %v731 = vmax.f32 %v613, -30.0
      %v732 = vmax.f32 %v616, -30.0
      %v733 = vmax.f32 %v618, -30.0
      %v734 = vmax.f32 %v621, -30.0
      %v735 = vmax.f32 %v623, -30.0
      %v736 = vmax.f32 %v626, -30.0
      %v737 = vmax.f32 %v628, -30.0
      %v738 = vmax.f32 %v631, -30.0
      %v739 = vmax.f32 %v633, -30.0
      %v740 = vmax.f32 %v636, -30.0
      %v741 = vmax.f32 %v638, -30.0
      %v742 = vmax.f32 %v641, -30.0
      %v743 = vmax.f32 %v643, -30.0
      %v744 = vmax.f32 %v646, -30.0
      %v745 = vmax.f32 %v648, -30.0
      %v746 = vmax.f32 %v651, -30.0
      %v747 = vmax.f32 %v653, -30.0
      %v748 = vmax.f32 %v656, -30.0
      %v749 = vmax.f32 %v658, -30.0
      %v750 = vmax.f32 %v661, -30.0
      %v751 = vmax.f32 %v663, -30.0
      %v752 = vmax.f32 %v666, -30.0
      %v753 = vmax.f32 %v668, -30.0
      %v754 = vmax.f32 %v671, -30.0
      %v755 = vmax.f32 %v673, -30.0
      %v756 = vmax.f32 %v676, -30.0
      %v757 = vmax.f32 %v678, -30.0
      %v758 = vmax.f32 %v681, -30.0
      %v759 = vmax.f32 %v683, -30.0
      %v760 = vmax.f32 %v686, -30.0
      %v761 = vmax.f32 %v688, -30.0
      %v762 = vmax.f32 %v691, -30.0
      %v763 = vmax.f32 %v693, -30.0
      %v764 = vmax.f32 %v696, -30.0
      %v765 = vmax.f32 %v698, -30.0
      %v766 = vmax.f32 %v701, -30.0
      %v767 = vmax.f32 %v703, -30.0
      %v768 = vmax.f32 %v706, -30.0
      %v769 = vmax.f32 %v708, -30.0
      %v770 = vmax.f32 %v711, -30.0
      %v771 = vmax.f32 %v713, -30.0
      %v772 = vmax.f32 %v716, -30.0
      %v773 = vmax.f32 %v718, -30.0
      %v774 = vmax.f32 %v721, -30.0
      %v775 = vmin.f32 %v724, 30.0
      %v776 = vmin.f32 %v725, 30.0
      %v777 = vmin.f32 %v726, 30.0
      %v778 = vmin.f32 %v727, 30.0
      %v779 = vmin.f32 %v728, 30.0
      %v780 = vmin.f32 %v729, 30.0
      %v781 = vmin.f32 %v730, 30.0
      %v782 = vmin.f32 %v731, 30.0
      %v783 = vmin.f32 %v732, 30.0
      %v784 = vmin.f32 %v733, 30.0
      %v785 = vmin.f32 %v734, 30.0
      %v786 = vmin.f32 %v735, 30.0
      %v787 = vmin.f32 %v736, 30.0
      %v788 = vmin.f32 %v737, 30.0
      %v789 = vmin.f32 %v738, 30.0
      %v790 = vmin.f32 %v739, 30.0
      %v791 = vmin.f32 %v740, 30.0
      %v792 = vmin.f32 %v741, 30.0
      %v793 = vmin.f32 %v742, 30.0
      %v794 = vmin.f32 %v743, 30.0
      %v795 = vmin.f32 %v744, 30.0
      %v796 = vmin.f32 %v745, 30.0
      %v797 = vmin.f32 %v746, 30.0
      %v798 = vmin.f32 %v747, 30.0
      %v799 = vmin.f32 %v748, 30.0
      %v800 = vmin.f32 %v749, 30.0
      %v801 = vmin.f32 %v750, 30.0
      %v802 = vmin.f32 %v751, 30.0
      %v803 = vmin.f32 %v752, 30.0
      %v804 = vmin.f32 %v753, 30.0
      %v805 = vmin.f32 %v754, 30.0
      %v806 = vmin.f32 %v755, 30.0
      %v807 = vmin.f32 %v756, 30.0
      %v808 = vmin.f32 %v757, 30.0
      %v809 = vmin.f32 %v758, 30.0
      %v810 = vmin.f32 %v759, 30.0
      %v811 = vmin.f32 %v760, 30.0
      %v812 = vmin.f32 %v761, 30.0
      %v813 = vmin.f32 %v762, 30.0
      %v814 = vmin.f32 %v763, 30.0
      %v815 = vmin.f32 %v764, 30.0
      %v816 = vmin.f32 %v765, 30.0
      %v817 = vmin.f32 %v766, 30.0
      %v818 = vmin.f32 %v767, 30.0
      %v819 = vmin.f32 %v768, 30.0
      %v820 = vmin.f32 %v769, 30.0
      %v821 = vmin.f32 %v770, 30.0
      %v822 = vmin.f32 %v771, 30.0
      %v823 = vmin.f32 %v772, 30.0
      %v824 = vmin.f32 %v773, 30.0
      %v825 = vmin.f32 %v774, 30.0
      %v826 = vsub.f32 0.0, %v775
      %v827 = vsub.f32 0.0, %v776
      %v828 = vsub.f32 0.0, %v777
      %v829 = vsub.f32 0.0, %v778
      %v830 = vsub.f32 0.0, %v779
      %v831 = vsub.f32 0.0, %v780
      %v832 = vsub.f32 0.0, %v781
      %v833 = vsub.f32 0.0, %v782
      %v834 = vsub.f32 0.0, %v783
      %v835 = vsub.f32 0.0, %v784
      %v836 = vsub.f32 0.0, %v785
      %v837 = vsub.f32 0.0, %v786
      %v838 = vsub.f32 0.0, %v787
      %v839 = vsub.f32 0.0, %v788
      %v840 = vsub.f32 0.0, %v789
      %v841 = vsub.f32 0.0, %v790
      %v842 = vsub.f32 0.0, %v791
      %v843 = vsub.f32 0.0, %v792
      %v844 = vsub.f32 0.0, %v793
      %v845 = vsub.f32 0.0, %v794
      %v846 = vsub.f32 0.0, %v795
      %v847 = vsub.f32 0.0, %v796
      %v848 = vsub.f32 0.0, %v797
      %v849 = vsub.f32 0.0, %v798
      %v850 = vsub.f32 0.0, %v799
      %v851 = vsub.f32 0.0, %v800
      %v852 = vsub.f32 0.0, %v801
      %v853 = vsub.f32 0.0, %v802
      %v854 = vsub.f32 0.0, %v803
      %v855 = vsub.f32 0.0, %v804
      %v856 = vsub.f32 0.0, %v805
      %v857 = vsub.f32 0.0, %v806
      %v858 = vsub.f32 0.0, %v807
      %v859 = vsub.f32 0.0, %v808
      %v860 = vsub.f32 0.0, %v809
      %v861 = vsub.f32 0.0, %v810
      %v862 = vsub.f32 0.0, %v811
      %v863 = vsub.f32 0.0, %v812
      %v864 = vsub.f32 0.0, %v813
      %v865 = vsub.f32 0.0, %v814
      %v866 = vsub.f32 0.0, %v815
      %v867 = vsub.f32 0.0, %v816
      %v868 = vsub.f32 0.0, %v817
      %v869 = vsub.f32 0.0, %v818
      %v870 = vsub.f32 0.0, %v819
      %v871 = vsub.f32 0.0, %v820
      %v872 = vsub.f32 0.0, %v821
      %v873 = vsub.f32 0.0, %v822
      %v874 = vsub.f32 0.0, %v823
      %v875 = vsub.f32 0.0, %v824
      %v876 = vsub.f32 0.0, %v825
      %v877 = vmul.f32 %v826, 1.442695
      %v878 = vpow.pop %v877
      %v879 = vmul.f32 %v827, 1.442695
      %v880 = vpow.pop %v879
      %v881 = vmul.f32 %v828, 1.442695
      %v882 = vpow.pop %v881
      %v883 = vmul.f32 %v829, 1.442695
      %v884 = vpow.pop %v883
      %v885 = vmul.f32 %v830, 1.442695
      %v886 = vpow.pop %v885
      %v887 = vmul.f32 %v831, 1.442695
      %v888 = vpow.pop %v887
      %v889 = vmul.f32 %v832, 1.442695
      %v890 = vpow.pop %v889
      %v891 = vmul.f32 %v833, 1.442695
      %v892 = vpow.pop %v891
      %v893 = vmul.f32 %v834, 1.442695
      %v894 = vpow.pop %v893
      %v895 = vmul.f32 %v835, 1.442695
      %v896 = vpow.pop %v895
      %v897 = vmul.f32 %v836, 1.442695
      %v898 = vpow.pop %v897
      %v899 = vmul.f32 %v837, 1.442695
      %v900 = vpow.pop %v899
      %v901 = vmul.f32 %v838, 1.442695
      %v902 = vpow.pop %v901
      %v903 = vmul.f32 %v839, 1.442695
      %v904 = vpow.pop %v903
      %v905 = vmul.f32 %v840, 1.442695
      %v906 = vpow.pop %v905
      %v907 = vmul.f32 %v841, 1.442695
      %v908 = vpow.pop %v907
      %v909 = vmul.f32 %v842, 1.442695
      %v910 = vpow.pop %v909
      %v911 = vmul.f32 %v843, 1.442695
      %v912 = vpow.pop %v911
      %v913 = vmul.f32 %v844, 1.442695
      %v914 = vpow.pop %v913
      %v915 = vmul.f32 %v845, 1.442695
      %v916 = vpow.pop %v915
      %v917 = vmul.f32 %v846, 1.442695
      %v918 = vpow.pop %v917
      %v919 = vmul.f32 %v847, 1.442695
      %v920 = vpow.pop %v919
      %v921 = vmul.f32 %v848, 1.442695
      %v922 = vpow.pop %v921
      %v923 = vmul.f32 %v849, 1.442695
      %v924 = vpow.pop %v923
      %v925 = vmul.f32 %v850, 1.442695
      %v926 = vpow.pop %v925
      %v927 = vmul.f32 %v851, 1.442695
      %v928 = vpow.pop %v927
      %v929 = vmul.f32 %v852, 1.442695
      %v930 = vpow.pop %v929
      %v931 = vmul.f32 %v853, 1.442695
      %v932 = vpow.pop %v931
      %v933 = vmul.f32 %v854, 1.442695
      %v934 = vpow.pop %v933
      %v935 = vmul.f32 %v855, 1.442695
      %v936 = vpow.pop %v935
      %v937 = vmul.f32 %v856, 1.442695
      %v938 = vpow.pop %v937
      %v939 = vmul.f32 %v857, 1.442695
      %v940 = vpow.pop %v939
      %v941 = vmul.f32 %v858, 1.442695
      %v942 = vpow.pop %v941
      %v943 = vmul.f32 %v859, 1.442695
      %v944 = vpow.pop %v943
      %v945 = vmul.f32 %v860, 1.442695
      %v946 = vpow.pop %v945
      %v947 = vmul.f32 %v861, 1.442695
      %v948 = vpow.pop %v947
      %v949 = vmul.f32 %v862, 1.442695
      %v950 = vpow.pop %v949
      %v951 = vmul.f32 %v863, 1.442695
      %v952 = vpow.pop %v951
      %v953 = vmul.f32 %v864, 1.442695
      %v954 = vpow.pop %v953
      %v955 = vmul.f32 %v865, 1.442695
      %v956 = vpow.pop %v955
      %v957 = vmul.f32 %v866, 1.442695
      %v958 = vpow.pop %v957
      %v959 = vmul.f32 %v867, 1.442695
      %v960 = vpow.pop %v959
      %v961 = vmul.f32 %v868, 1.442695
      %v962 = vpow.pop %v961
      %v963 = vmul.f32 %v869, 1.442695
      %v964 = vpow.pop %v963
      %v965 = vmul.f32 %v870, 1.442695
      %v966 = vpow.pop %v965
      %v967 = vmul.f32 %v871, 1.442695
      %v968 = vpow.pop %v967
      %v969 = vmul.f32 %v872, 1.442695
      %v970 = vpow.pop %v969
      %v971 = vmul.f32 %v873, 1.442695
      %v972 = vpow.pop %v971
      %v973 = vmul.f32 %v874, 1.442695
      %v974 = vpow.pop %v973
      %v975 = vmul.f32 %v875, 1.442695
      %v976 = vpow.pop %v975
      %v977 = vmul.f32 %v876, 1.442695
      %v978 = vpow.pop %v977
      %v979 = vadd.f32 %v878, 1.0
      %v980 = vadd.f32 %v880, 1.0
      %v981 = vadd.f32 %v882, 1.0
      %v982 = vadd.f32 %v884, 1.0
      %v983 = vadd.f32 %v886, 1.0
      %v984 = vadd.f32 %v888, 1.0
      %v985 = vadd.f32 %v890, 1.0
      %v986 = vadd.f32 %v892, 1.0
      %v987 = vadd.f32 %v894, 1.0
      %v988 = vadd.f32 %v896, 1.0
      %v989 = vadd.f32 %v898, 1.0
      %v990 = vadd.f32 %v900, 1.0
      %v991 = vadd.f32 %v902, 1.0
      %v992 = vadd.f32 %v904, 1.0
      %v993 = vadd.f32 %v906, 1.0
      %v994 = vadd.f32 %v908, 1.0
      %v995 = vadd.f32 %v910, 1.0
      %v996 = vadd.f32 %v912, 1.0
      %v997 = vadd.f32 %v914, 1.0
      %v998 = vadd.f32 %v916, 1.0
      %v999 = vadd.f32 %v918, 1.0
      %v1000 = vadd.f32 %v920, 1.0
      %v1001 = vadd.f32 %v922, 1.0
      %v1002 = vadd.f32 %v924, 1.0
      %v1003 = vadd.f32 %v926, 1.0
      %v1004 = vadd.f32 %v928, 1.0
      %v1005 = vadd.f32 %v930, 1.0
      %v1006 = vadd.f32 %v932, 1.0
      %v1007 = vadd.f32 %v934, 1.0
      %v1008 = vadd.f32 %v936, 1.0
      %v1009 = vadd.f32 %v938, 1.0
      %v1010 = vadd.f32 %v940, 1.0
      %v1011 = vadd.f32 %v942, 1.0
      %v1012 = vadd.f32 %v944, 1.0
      %v1013 = vadd.f32 %v946, 1.0
      %v1014 = vadd.f32 %v948, 1.0
      %v1015 = vadd.f32 %v950, 1.0
      %v1016 = vadd.f32 %v952, 1.0
      %v1017 = vadd.f32 %v954, 1.0
      %v1018 = vadd.f32 %v956, 1.0
      %v1019 = vadd.f32 %v958, 1.0
      %v1020 = vadd.f32 %v960, 1.0
      %v1021 = vadd.f32 %v962, 1.0
      %v1022 = vadd.f32 %v964, 1.0
      %v1023 = vadd.f32 %v966, 1.0
      %v1024 = vadd.f32 %v968, 1.0
      %v1025 = vadd.f32 %v970, 1.0
      %v1026 = vadd.f32 %v972, 1.0
      %v1027 = vadd.f32 %v974, 1.0
      %v1028 = vadd.f32 %v976, 1.0
      %v1029 = vadd.f32 %v978, 1.0
      %v1030 = vrcp.pop %v979
      %v1031 = vrcp.pop %v980
      %v1032 = vrcp.pop %v981
      %v1033 = vrcp.pop %v982
      %v1034 = vrcp.pop %v983
      %v1035 = vrcp.pop %v984
      %v1036 = vrcp.pop %v985
      %v1037 = vrcp.pop %v986
      %v1038 = vrcp.pop %v987
      %v1039 = vrcp.pop %v988
      %v1040 = vrcp.pop %v989
      %v1041 = vrcp.pop %v990
      %v1042 = vrcp.pop %v991
      %v1043 = vrcp.pop %v992
      %v1044 = vrcp.pop %v993
      %v1045 = vrcp.pop %v994
      %v1046 = vrcp.pop %v995
      %v1047 = vrcp.pop %v996
      %v1048 = vrcp.pop %v997
      %v1049 = vrcp.pop %v998
      %v1050 = vrcp.pop %v999
      %v1051 = vrcp.pop %v1000
      %v1052 = vrcp.pop %v1001
      %v1053 = vrcp.pop %v1002
      %v1054 = vrcp.pop %v1003
      %v1055 = vrcp.pop %v1004
      %v1056 = vrcp.pop %v1005
      %v1057 = vrcp.pop %v1006
      %v1058 = vrcp.pop %v1007
      %v1059 = vrcp.pop %v1008
      %v1060 = vrcp.pop %v1009
      %v1061 = vrcp.pop %v1010
      %v1062 = vrcp.pop %v1011
      %v1063 = vrcp.pop %v1012
      %v1064 = vrcp.pop %v1013
      %v1065 = vrcp.pop %v1014
      %v1066 = vrcp.pop %v1015
      %v1067 = vrcp.pop %v1016
      %v1068 = vrcp.pop %v1017
      %v1069 = vrcp.pop %v1018
      %v1070 = vrcp.pop %v1019
      %v1071 = vrcp.pop %v1020
      %v1072 = vrcp.pop %v1021
      %v1073 = vrcp.pop %v1022
      %v1074 = vrcp.pop %v1023
      %v1075 = vrcp.pop %v1024
      %v1076 = vrcp.pop %v1025
      %v1077 = vrcp.pop %v1026
      %v1078 = vrcp.pop %v1027
      %v1079 = vrcp.pop %v1028
      %v1080 = vrcp.pop %v1029
      %vm1081 = vcmask 7168
      %1082 = vst.msk [vmem:[%s262] sm:$0xff] %vm1081, %v1030
      %1083 = vst.msk [vmem:[%s262 + $0x8] sm:$0xff] %vm1081, %v1031
      %1084 = vst.msk [vmem:[%s262 + $0x10] sm:$0xff] %vm1081, %v1032
      %1085 = vst.msk [vmem:[%s262 + $0x18] sm:$0xff] %vm1081, %v1033
      %1086 = vst.msk [vmem:[%s262 + $0x20] sm:$0xff] %vm1081, %v1034
      %1087 = vst.msk [vmem:[%s262 + $0x28] sm:$0xff] %vm1081, %v1035
      %1088 = vst.msk [vmem:[%s262 + $0x30] sm:$0xff] %vm1081, %v1036
      %1089 = vst.msk [vmem:[%s262 + $0x38] sm:$0xff] %vm1081, %v1037
      %1090 = vst.msk [vmem:[%s262 + $0x40] sm:$0xff] %vm1081, %v1038
      %1091 = vst.msk [vmem:[%s262 + $0x48] sm:$0xff] %vm1081, %v1039
      %1092 = vst.msk [vmem:[%s262 + $0x50] sm:$0xff] %vm1081, %v1040
      %1093 = vst.msk [vmem:[%s262 + $0x58] sm:$0xff] %vm1081, %v1041
      %1094 = vst.msk [vmem:[%s262 + $0x60] sm:$0xff] %vm1081, %v1042
      %1095 = vst.msk [vmem:[%s262 + $0x68] sm:$0xff] %vm1081, %v1043
      %1096 = vst.msk [vmem:[%s262 + $0x70] sm:$0xff] %vm1081, %v1044
      %1097 = vst.msk [vmem:[%s262 + $0x78] sm:$0xff] %vm1081, %v1045
      %1098 = vst.msk [vmem:[%s262 + $0x80] sm:$0xff] %vm1081, %v1046
      %1099 = vst.msk [vmem:[%s262 + $0x88] sm:$0xff] %vm1081, %v1047
      %1100 = vst.msk [vmem:[%s262 + $0x90] sm:$0xff] %vm1081, %v1048
      %1101 = vst.msk [vmem:[%s262 + $0x98] sm:$0xff] %vm1081, %v1049
      %1102 = vst.msk [vmem:[%s262 + $0xa0] sm:$0xff] %vm1081, %v1050
      %1103 = vst.msk [vmem:[%s262 + $0xa8] sm:$0xff] %vm1081, %v1051
      %1104 = vst.msk [vmem:[%s262 + $0xb0] sm:$0xff] %vm1081, %v1052
      %1105 = vst.msk [vmem:[%s262 + $0xb8] sm:$0xff] %vm1081, %v1053
      %1106 = vst.msk [vmem:[%s262 + $0xc0] sm:$0xff] %vm1081, %v1054
      %1107 = vst.msk [vmem:[%s262 + $0xc8] sm:$0xff] %vm1081, %v1055
      %1108 = vst.msk [vmem:[%s262 + $0xd0] sm:$0xff] %vm1081, %v1056
      %1109 = vst.msk [vmem:[%s262 + $0xd8] sm:$0xff] %vm1081, %v1057
      %1110 = vst.msk [vmem:[%s262 + $0xe0] sm:$0xff] %vm1081, %v1058
      %1111 = vst.msk [vmem:[%s262 + $0xe8] sm:$0xff] %vm1081, %v1059
      %1112 = vst.msk [vmem:[%s262 + $0xf0] sm:$0xff] %vm1081, %v1060
      %1113 = vst.msk [vmem:[%s262 + $0xf8] sm:$0xff] %vm1081, %v1061
      %1114 = vst.msk [vmem:[%s262 + $0x100] sm:$0xff] %vm1081, %v1062
      %1115 = vst.msk [vmem:[%s262 + $0x108] sm:$0xff] %vm1081, %v1063
      %1116 = vst.msk [vmem:[%s262 + $0x110] sm:$0xff] %vm1081, %v1064
      %1117 = vst.msk [vmem:[%s262 + $0x118] sm:$0xff] %vm1081, %v1065
      %1118 = vst.msk [vmem:[%s262 + $0x120] sm:$0xff] %vm1081, %v1066
      %1119 = vst.msk [vmem:[%s262 + $0x128] sm:$0xff] %vm1081, %v1067
      %1120 = vst.msk [vmem:[%s262 + $0x130] sm:$0xff] %vm1081, %v1068
      %1121 = vst.msk [vmem:[%s262 + $0x138] sm:$0xff] %vm1081, %v1069
      %1122 = vst.msk [vmem:[%s262 + $0x140] sm:$0xff] %vm1081, %v1070
      %1123 = vst.msk [vmem:[%s262 + $0x148] sm:$0xff] %vm1081, %v1071
      %1124 = vst.msk [vmem:[%s262 + $0x150] sm:$0xff] %vm1081, %v1072
      %1125 = vst.msk [vmem:[%s262 + $0x158] sm:$0xff] %vm1081, %v1073
      %1126 = vst.msk [vmem:[%s262 + $0x160] sm:$0xff] %vm1081, %v1074
      %1127 = vst.msk [vmem:[%s262 + $0x168] sm:$0xff] %vm1081, %v1075
      %1128 = vst.msk [vmem:[%s262 + $0x170] sm:$0xff] %vm1081, %v1076
      %1129 = vst.msk [vmem:[%s262 + $0x178] sm:$0xff] %vm1081, %v1077
      %1130 = vst.msk [vmem:[%s262 + $0x180] sm:$0xff] %vm1081, %v1078
      %1131 = vst.msk [vmem:[%s262 + $0x188] sm:$0xff] %vm1081, %v1079
      %1132 = vst.msk [vmem:[%s262 + $0x190] sm:$0xff] %vm1081, %v1080
      %s1133 = smul.u32 51, %s20
      %p1134 = scmp.lt.s32.totalorder %s19, 0
      %s1135 = scalar_select %p1134, %s19, 0
      %p1136 = scmp.lt.s32.totalorder %s1133, 101
      %s1137 = scalar_select %p1136, %s1133, 101
      %p1138 = scmp.lt.s32.totalorder %s21, 0
      %s1139 = scalar_select %p1138, %s21, 0
      %s1140 = sadd.s32 %s1139, %s1137
      %s1141 = smul.addr %s1135, 102
      %s1142 = sadd.s32 %s1140, %s1141
      %s1143 = smul.addr %s1142, 8
      %s1144 = scalar_lea.vmem %s3, %s1143
      // Predicated region
      $region33: #{conv2d_1x1_sigmoid.1} parent=31 // pred_check
        %p1145 = pneg %p135
      $region34: #{conv2d_1x1_sigmoid.1} parent=31 // pred_check_branch
        %1147 = sbr.rel (%p1145) target = $region36
      $region35: #{conv2d_1x1_sigmoid.1} parent=31 // pred_region
        %s1148 = smul.u32 51, %s20
      $region36: #{conv2d_1x1_sigmoid.1} parent=31 // pred_fallthru
        _
    $region32: #{conv2d_1x1_sigmoid.1} parent=5 // pred_fallthru
      _
    %p1149 = scmp.le.s32.totalorder 2, %s9
    // Predicated region
    $region37: #{conv2d_1x1_sigmoid.1} parent=5 // pred_check
      %p1150 = pneg %p1149
    $region38: #{conv2d_1x1_sigmoid.1} parent=5 // pred_check_branch
      %1152 = sbr.rel (%p1150) target = $region40
    $region39: #{conv2d_1x1_sigmoid.1} parent=5 // pred_region
      %s1153 = ssub.s32 %s9, 2
      // Predicated region
      $region41: #{conv2d_1x1_sigmoid.1} parent=39 // pred_check
        %p1154 = pneg %p141
      $region42: #{conv2d_1x1_sigmoid.1} parent=39 // pred_check_branch
        %1156 = sbr.rel (%p1154) target = $region44
      $region43: #{conv2d_1x1_sigmoid.1} parent=39 // pred_region
        %s1157 = smul.u32 51, %s23
        %p1158 = scmp.lt.s32.totalorder %s22, 0
        %s1159 = scalar_select %p1158, %s22, 0
        %p1160 = scmp.lt.s32.totalorder %s1157, 101
        %s1161 = scalar_select %p1160, %s1157, 101
        %p1162 = scmp.lt.s32.totalorder %s24, 0
        %s1163 = scalar_select %p1162, %s24, 0
        %s1164 = sadd.s32 %s1163, %s1161
        %s1165 = smul.addr %s1159, 102
        %s1166 = sadd.s32 %s1164, %s1165
        %s1167 = smul.addr %s1166, 8
        %s1168 = scalar_lea.vmem %s3, %s1167
      $region44: #{conv2d_1x1_sigmoid.1} parent=39 // pred_fallthru
        _
    $region40: #{conv2d_1x1_sigmoid.1} parent=5 // pred_fallthru
      _
  $region6: #{conv2d_1x1_sigmoid.1} parent=0 // loop_footer
    %s13 = sadd.s32 1, %s9
  $region7: #{conv2d_1x1_sigmoid.1} parent=0 // loop_footer_branch
    %8 = sbr.rel target = $region3
  $region8: #{conv2d_1x1_sigmoid.1} parent=0 // loop_exit
    _

</llo_original>
